<compile_context>
chip_gen: v7x
topology: tpu7x:2x2x1
jax: 0.10.0
libtpu: 0.0.40
codegen_flags: <defaults>
</compile_context>

<pallas_src>
import jax
import jax.numpy as jnp
from jax.experimental import pallas as pl
from jax.experimental.pallas import tpu as pltpu


# ----------------------------------------------------------------------------
# Pallas kernel: single invocation, whole forward pass inside.
#   x_ref    : (B*T, I)   batch-major-flattened input (row b*T + t = x[b, t])
#   w_ih_ref : (I, 4H)    packed W_ih^T, gate order i|f|g|o along lanes
#   w_hh_ref : (H, 4H)    packed W_hh^T, gate order i|f|g|o along lanes
#   b_ref    : (1, 4H)    b_ih + b_hh, same gate order
#   w_fc_ref : (H, O)     final Linear weight, transposed
#   b_fc_ref : (1, O)     final Linear bias
#   out_ref  : (B, O)
# ----------------------------------------------------------------------------
def _stateful_lstm_kernel(x_ref, w_ih_ref, w_hh_ref, b_ref, w_fc_ref, b_fc_ref,
                          out_ref):
    BT, I = x_ref.shape
    H4 = w_hh_ref.shape[1]
    H = H4 // 4
    B = out_ref.shape[0]
    T = BT // B

    # --- Input projection, all timesteps at once (one lane-dense MXU matmul). ---
    # gx[b*T + t, :] = x[b, t, :] @ W_ih^T + (b_ih + b_hh)   -> (B*T, 4H) = (16, 128)
    gx = jnp.dot(x_ref[...], w_ih_ref[...],
                 preferred_element_type=jnp.float32) + b_ref[...]
    gx = gx.reshape(B, T, H4)            # layout-preserving split of sublane dim

    # Loop-invariant fused recurrent weight: one dense (32, 128) slab in vregs.
    w_hh = w_hh_ref[...]

    h = jnp.zeros((B, H), jnp.float32)
    c = jnp.zeros((B, H), jnp.float32)
    pool = jnp.full((B, H), -jnp.inf, jnp.float32)

    # Fully unrolled recurrence (T=8): static slices, state stays in vregs.
    # TODO(synk): for large / variable T switch to lax.fori_loop with partial unroll.
    for t in range(T):
        # Single fused-gate recurrent matmul: (B, H) @ (H, 4H) -> (B, 4H).
        gates = gx[:, t, :] + jnp.dot(h, w_hh,
                                      preferred_element_type=jnp.float32)
        # Slab-wise activations (2 EUP pushes), then static 32-lane gate slices.
        sig = jax.nn.sigmoid(gates)
        tnh = jnp.tanh(gates)
        i_g = sig[:, 0 * H:1 * H]        # input gate
        f_g = sig[:, 1 * H:2 * H]        # forget gate
        g_g = tnh[:, 2 * H:3 * H]        # cell candidate
        o_g = sig[:, 3 * H:4 * H]        # output gate

        c = f_g * c + i_g * g_g
        h = o_g * jnp.tanh(c)
        pool = jnp.maximum(pool, h)      # max-pool over time

    # Final Linear on the pooled hidden state (single small store at the end).
    out_ref[...] = (
        jnp.dot(pool, w_fc_ref[...], preferred_element_type=jnp.float32)
        + b_fc_ref[...]
    )


# ----------------------------------------------------------------------------
# One-time parameter preparation (at parameter-load time, NOT per call).
# PyTorch packs gate rows as [i, f, g, o]; transposing keeps that order along
# the lane (column) axis, so the fused slabs slice back out with static offsets.
# ----------------------------------------------------------------------------
def prepare_params(w_ih, w_hh, b_ih, b_hh, w_fc, b_fc):
    H4, _ = w_ih.shape
    w_ih_packed = jnp.transpose(w_ih)            # (I, 4H)
    w_hh_packed = jnp.transpose(w_hh)            # (H, 4H)
    b_packed = (b_ih + b_hh).reshape(1, H4)      # (1, 4H)
    w_fc_t = jnp.transpose(w_fc)                 # (H, O)
    b_fc_r = b_fc.reshape(1, -1)                 # (1, O)
    return w_ih_packed, w_hh_packed, b_packed, w_fc_t, b_fc_r


# ----------------------------------------------------------------------------
# Jitted forward: a single pallas_call (no separate XLA compute ops).
# ----------------------------------------------------------------------------
@jax.jit
def stateful_lstm_forward(x, w_ih_p, w_hh_p, b_p, w_fc_t, b_fc_r):
    """x: (B, T, I) batch-first float32. Returns (B, output_size, 1)."""
    B, T, I = x.shape
    O = w_fc_t.shape[-1]

    # Contiguous row-major flatten (bitcast-level, no data movement): row b*T + t.
    x_flat = x.reshape(B * T, I)

    vmem = pl.BlockSpec(memory_space=pltpu.MemorySpace.VMEM)
    out = pl.pallas_call(
        _stateful_lstm_kernel,
        out_shape=jax.ShapeDtypeStruct((B, O), jnp.float32),
        in_specs=[vmem, vmem, vmem, vmem, vmem, vmem],
        out_specs=vmem,
    )(x_flat, w_ih_p, w_hh_p, b_p, w_fc_t, b_fc_r)

    # PyTorch: out.unsqueeze(1).transpose(1, 2) -> (B, O, 1)
    return out[:, :, None]


# ----------------------------------------------------------------------------
# Pure-JAX reference (mirrors torch.nn.LSTM + max pool + Linear) for validation.
# ----------------------------------------------------------------------------
def stateful_lstm_ref(x, w_ih, w_hh, b_ih, b_hh, w_fc, b_fc):
    B, T, I = x.shape
    H = w_hh.shape[1]

    def step(carry, x_t):
        h, c = carry
        gates = x_t @ w_ih.T + b_ih + h @ w_hh.T + b_hh
        i_g = jax.nn.sigmoid(gates[:, 0 * H:1 * H])
        f_g = jax.nn.sigmoid(gates[:, 1 * H:2 * H])
        g_g = jnp.tanh(gates[:, 2 * H:3 * H])
        o_g = jax.nn.sigmoid(gates[:, 3 * H:4 * H])
        c_new = f_g * c + i_g * g_g
        h_new = o_g * jnp.tanh(c_new)
        return (h_new, c_new), h_new

    h0 = jnp.zeros((B, H), jnp.float32)
    c0 = jnp.zeros((B, H), jnp.float32)
    _, hs = jax.lax.scan(step, (h0, c0), jnp.transpose(x, (1, 0, 2)))
    out_seq = jnp.transpose(hs, (1, 0, 2))          # (B, T, H)
    pooled = jnp.max(out_seq, axis=1)               # pool == 'max'
    out = pooled @ w_fc.T + b_fc
    return out[:, :, None]


# ----------------------------------------------------------------------------
# Main: deterministic params + inputs, run, check, print.
# ----------------------------------------------------------------------------
if __name__ == "__main__":
    B, T = 2, 8
    INPUT_SIZE, HIDDEN, OUTPUT_SIZE = 4, 32, 3

    key = jax.random.PRNGKey(0)
    k_x, k1, k2, k3, k4, k5, k6 = jax.random.split(key, 7)
    bound = 1.0 / jnp.sqrt(HIDDEN)

    x = jax.random.normal(k_x, (B, T, INPUT_SIZE), dtype=jnp.float32)

    w_ih = jax.random.uniform(k1, (4 * HIDDEN, INPUT_SIZE), jnp.float32, -bound, bound)
    w_hh = jax.random.uniform(k2, (4 * HIDDEN, HIDDEN), jnp.float32, -bound, bound)
    b_ih = jax.random.uniform(k3, (4 * HIDDEN,), jnp.float32, -bound, bound)
    b_hh = jax.random.uniform(k4, (4 * HIDDEN,), jnp.float32, -bound, bound)
    w_fc = jax.random.uniform(k5, (OUTPUT_SIZE, HIDDEN), jnp.float32, -bound, bound)
    b_fc = jax.random.uniform(k6, (OUTPUT_SIZE,), jnp.float32, -bound, bound)

    # One-time parameter prep (transposes / gate packing), outside the jitted forward.
    params = prepare_params(w_ih, w_hh, b_ih, b_hh, w_fc, b_fc)

    out = stateful_lstm_forward(x, *params)
    out = jax.block_until_ready(out)

    ref = stateful_lstm_ref(x, w_ih, w_hh, b_ih, b_hh, w_fc, b_fc)
    assert out.shape == (B, OUTPUT_SIZE, 1), out.shape
    assert jnp.allclose(out, ref, rtol=1e-4, atol=1e-4), (out, ref)

    # TODO(synk): packed_input / state_connected / bidirectional / dropout /
    # 'mean' / 'attention' pool paths of the PyTorch module are not exercised
    # here (default call path only).  If T == 0 the pool stays -inf (same
    # degenerate case as torch.max on an empty time axis).
    print("KERNEL_OK")
</pallas_src>

<mosaic_0001>
module attributes {stable_mosaic.version = 11 : i64} {
  func.func @_stateful_lstm_kernel(%arg0: memref<16x4xf32, #tpu.memory_space<vmem>>, %arg1: memref<4x128xf32, #tpu.memory_space<vmem>>, %arg2: memref<32x128xf32, #tpu.memory_space<vmem>>, %arg3: memref<1x128xf32, #tpu.memory_space<vmem>>, %arg4: memref<32x3xf32, #tpu.memory_space<vmem>>, %arg5: memref<1x3xf32, #tpu.memory_space<vmem>>, %arg6: memref<2x3xf32, #tpu.memory_space<vmem>>) attributes {dimension_semantics = [], scalar_prefetch = 0 : i64, scratch_operands = 0 : i64, tpu.core_type = #tpu.core_type<tc>} {
    %c0 = arith.constant 0 : index
    %c0_0 = arith.constant 0 : index
    %0 = vector.load %arg0[%c0, %c0_0] : memref<16x4xf32, #tpu.memory_space<vmem>>, vector<16x4xf32>
    %c0_1 = arith.constant 0 : index
    %c0_2 = arith.constant 0 : index
    %1 = vector.load %arg1[%c0_1, %c0_2] : memref<4x128xf32, #tpu.memory_space<vmem>>, vector<4x128xf32>
    %cst = arith.constant dense<0.000000e+00> : vector<16x128xf32>
    %2 = tpu.matmul %0, %1, %cst {dimension_numbers = #tpu.dot_dimension_numbers<[1], [0], [0], [1], [0, 0, 1, 1], [], []>} : vector<16x4xf32>, vector<4x128xf32>, vector<16x128xf32> -> vector<16x128xf32>
    %c0_3 = arith.constant 0 : index
    %c0_4 = arith.constant 0 : index
    %3 = vector.load %arg3[%c0_3, %c0_4] : memref<1x128xf32, #tpu.memory_space<vmem>>, vector<1x128xf32>
    %4 = vector.broadcast %3 : vector<1x128xf32> to vector<16x128xf32>
    %5 = arith.addf %2, %4 : vector<16x128xf32>
    %6 = vector.shape_cast %5 : vector<16x128xf32> to vector<2x8x128xf32>
    %c0_5 = arith.constant 0 : index
    %c0_6 = arith.constant 0 : index
    %7 = vector.load %arg2[%c0_5, %c0_6] : memref<32x128xf32, #tpu.memory_space<vmem>>, vector<32x128xf32>
    %cst_7 = arith.constant 0.000000e+00 : f32
    %8 = vector.broadcast %cst_7 : f32 to vector<2x32xf32>
    %cst_8 = arith.constant 0.000000e+00 : f32
    %9 = vector.broadcast %cst_8 : f32 to vector<2x32xf32>
    %cst_9 = arith.constant 0xFF800000 : f32
    %10 = vector.broadcast %cst_9 : f32 to vector<2x32xf32>
    %11 = vector.extract_strided_slice %6 {offsets = [0, 0, 0], sizes = [2, 1, 128], strides = [1, 1, 1]} : vector<2x8x128xf32> to vector<2x1x128xf32>
    %12 = vector.shape_cast %11 : vector<2x1x128xf32> to vector<2x128xf32>
    %cst_10 = arith.constant dense<0.000000e+00> : vector<2x128xf32>
    %13 = tpu.matmul %8, %7, %cst_10 {dimension_numbers = #tpu.dot_dimension_numbers<[1], [0], [0], [1], [0, 0, 1, 1], [], []>} : vector<2x32xf32>, vector<32x128xf32>, vector<2x128xf32> -> vector<2x128xf32>
    %14 = arith.addf %12, %13 : vector<2x128xf32>
    %15 = arith.negf %14 : vector<2x128xf32>
    %16 = math.exp %15 : vector<2x128xf32>
    %cst_11 = arith.constant 1.000000e+00 : f32
    %17 = vector.broadcast %cst_11 : f32 to vector<2x128xf32>
    %18 = arith.addf %17, %16 : vector<2x128xf32>
    %19 = arith.divf %17, %18 : vector<2x128xf32>
    %20 = math.tanh %14 : vector<2x128xf32>
    %21 = vector.extract_strided_slice %19 {offsets = [0, 0], sizes = [2, 32], strides = [1, 1]} : vector<2x128xf32> to vector<2x32xf32>
    %22 = vector.extract_strided_slice %19 {offsets = [0, 32], sizes = [2, 32], strides = [1, 1]} : vector<2x128xf32> to vector<2x32xf32>
    %23 = vector.extract_strided_slice %20 {offsets = [0, 64], sizes = [2, 32], strides = [1, 1]} : vector<2x128xf32> to vector<2x32xf32>
    %24 = vector.extract_strided_slice %19 {offsets = [0, 96], sizes = [2, 32], strides = [1, 1]} : vector<2x128xf32> to vector<2x32xf32>
    %25 = arith.mulf %22, %9 : vector<2x32xf32>
    %26 = arith.mulf %21, %23 : vector<2x32xf32>
    %27 = arith.addf %25, %26 : vector<2x32xf32>
    %28 = math.tanh %27 : vector<2x32xf32>
    %29 = arith.mulf %24, %28 : vector<2x32xf32>
    %30 = arith.maximumf %10, %29 : vector<2x32xf32>
    %31 = vector.extract_strided_slice %6 {offsets = [0, 1, 0], sizes = [2, 1, 128], strides = [1, 1, 1]} : vector<2x8x128xf32> to vector<2x1x128xf32>
    %32 = vector.shape_cast %31 : vector<2x1x128xf32> to vector<2x128xf32>
    %cst_12 = arith.constant dense<0.000000e+00> : vector<2x128xf32>
    %33 = tpu.matmul %29, %7, %cst_12 {dimension_numbers = #tpu.dot_dimension_numbers<[1], [0], [0], [1], [0, 0, 1, 1], [], []>} : vector<2x32xf32>, vector<32x128xf32>, vector<2x128xf32> -> vector<2x128xf32>
    %34 = arith.addf %32, %33 : vector<2x128xf32>
    %35 = arith.negf %34 : vector<2x128xf32>
    %36 = math.exp %35 : vector<2x128xf32>
    %cst_13 = arith.constant 1.000000e+00 : f32
    %37 = vector.broadcast %cst_13 : f32 to vector<2x128xf32>
    %38 = arith.addf %37, %36 : vector<2x128xf32>
    %39 = arith.divf %37, %38 : vector<2x128xf32>
    %40 = math.tanh %34 : vector<2x128xf32>
    %41 = vector.extract_strided_slice %39 {offsets = [0, 0], sizes = [2, 32], strides = [1, 1]} : vector<2x128xf32> to vector<2x32xf32>
    %42 = vector.extract_strided_slice %39 {offsets = [0, 32], sizes = [2, 32], strides = [1, 1]} : vector<2x128xf32> to vector<2x32xf32>
    %43 = vector.extract_strided_slice %40 {offsets = [0, 64], sizes = [2, 32], strides = [1, 1]} : vector<2x128xf32> to vector<2x32xf32>
    %44 = vector.extract_strided_slice %39 {offsets = [0, 96], sizes = [2, 32], strides = [1, 1]} : vector<2x128xf32> to vector<2x32xf32>
    %45 = arith.mulf %42, %27 : vector<2x32xf32>
    %46 = arith.mulf %41, %43 : vector<2x32xf32>
    %47 = arith.addf %45, %46 : vector<2x32xf32>
    %48 = math.tanh %47 : vector<2x32xf32>
    %49 = arith.mulf %44, %48 : vector<2x32xf32>
    %50 = arith.maximumf %30, %49 : vector<2x32xf32>
    %51 = vector.extract_strided_slice %6 {offsets = [0, 2, 0], sizes = [2, 1, 128], strides = [1, 1, 1]} : vector<2x8x128xf32> to vector<2x1x128xf32>
    %52 = vector.shape_cast %51 : vector<2x1x128xf32> to vector<2x128xf32>
    %cst_14 = arith.constant dense<0.000000e+00> : vector<2x128xf32>
    %53 = tpu.matmul %49, %7, %cst_14 {dimension_numbers = #tpu.dot_dimension_numbers<[1], [0], [0], [1], [0, 0, 1, 1], [], []>} : vector<2x32xf32>, vector<32x128xf32>, vector<2x128xf32> -> vector<2x128xf32>
    %54 = arith.addf %52, %53 : vector<2x128xf32>
    %55 = arith.negf %54 : vector<2x128xf32>
    %56 = math.exp %55 : vector<2x128xf32>
    %cst_15 = arith.constant 1.000000e+00 : f32
    %57 = vector.broadcast %cst_15 : f32 to vector<2x128xf32>
    %58 = arith.addf %57, %56 : vector<2x128xf32>
    %59 = arith.divf %57, %58 : vector<2x128xf32>
    %60 = math.tanh %54 : vector<2x128xf32>
    %61 = vector.extract_strided_slice %59 {offsets = [0, 0], sizes = [2, 32], strides = [1, 1]} : vector<2x128xf32> to vector<2x32xf32>
    %62 = vector.extract_strided_slice %59 {offsets = [0, 32], sizes = [2, 32], strides = [1, 1]} : vector<2x128xf32> to vector<2x32xf32>
    %63 = vector.extract_strided_slice %60 {offsets = [0, 64], sizes = [2, 32], strides = [1, 1]} : vector<2x128xf32> to vector<2x32xf32>
    %64 = vector.extract_strided_slice %59 {offsets = [0, 96], sizes = [2, 32], strides = [1, 1]} : vector<2x128xf32> to vector<2x32xf32>
    %65 = arith.mulf %62, %47 : vector<2x32xf32>
    %66 = arith.mulf %61, %63 : vector<2x32xf32>
    %67 = arith.addf %65, %66 : vector<2x32xf32>
    %68 = math.tanh %67 : vector<2x32xf32>
    %69 = arith.mulf %64, %68 : vector<2x32xf32>
    %70 = arith.maximumf %50, %69 : vector<2x32xf32>
    %71 = vector.extract_strided_slice %6 {offsets = [0, 3, 0], sizes = [2, 1, 128], strides = [1, 1, 1]} : vector<2x8x128xf32> to vector<2x1x128xf32>
    %72 = vector.shape_cast %71 : vector<2x1x128xf32> to vector<2x128xf32>
    %cst_16 = arith.constant dense<0.000000e+00> : vector<2x128xf32>
    %73 = tpu.matmul %69, %7, %cst_16 {dimension_numbers = #tpu.dot_dimension_numbers<[1], [0], [0], [1], [0, 0, 1, 1], [], []>} : vector<2x32xf32>, vector<32x128xf32>, vector<2x128xf32> -> vector<2x128xf32>
    %74 = arith.addf %72, %73 : vector<2x128xf32>
    %75 = arith.negf %74 : vector<2x128xf32>
    %76 = math.exp %75 : vector<2x128xf32>
    %cst_17 = arith.constant 1.000000e+00 : f32
    %77 = vector.broadcast %cst_17 : f32 to vector<2x128xf32>
    %78 = arith.addf %77, %76 : vector<2x128xf32>
    %79 = arith.divf %77, %78 : vector<2x128xf32>
    %80 = math.tanh %74 : vector<2x128xf32>
    %81 = vector.extract_strided_slice %79 {offsets = [0, 0], sizes = [2, 32], strides = [1, 1]} : vector<2x128xf32> to vector<2x32xf32>
    %82 = vector.extract_strided_slice %79 {offsets = [0, 32], sizes = [2, 32], strides = [1, 1]} : vector<2x128xf32> to vector<2x32xf32>
    %83 = vector.extract_strided_slice %80 {offsets = [0, 64], sizes = [2, 32], strides = [1, 1]} : vector<2x128xf32> to vector<2x32xf32>
    %84 = vector.extract_strided_slice %79 {offsets = [0, 96], sizes = [2, 32], strides = [1, 1]} : vector<2x128xf32> to vector<2x32xf32>
    %85 = arith.mulf %82, %67 : vector<2x32xf32>
    %86 = arith.mulf %81, %83 : vector<2x32xf32>
    %87 = arith.addf %85, %86 : vector<2x32xf32>
    %88 = math.tanh %87 : vector<2x32xf32>
    %89 = arith.mulf %84, %88 : vector<2x32xf32>
    %90 = arith.maximumf %70, %89 : vector<2x32xf32>
    %91 = vector.extract_strided_slice %6 {offsets = [0, 4, 0], sizes = [2, 1, 128], strides = [1, 1, 1]} : vector<2x8x128xf32> to vector<2x1x128xf32>
    %92 = vector.shape_cast %91 : vector<2x1x128xf32> to vector<2x128xf32>
    %cst_18 = arith.constant dense<0.000000e+00> : vector<2x128xf32>
    %93 = tpu.matmul %89, %7, %cst_18 {dimension_numbers = #tpu.dot_dimension_numbers<[1], [0], [0], [1], [0, 0, 1, 1], [], []>} : vector<2x32xf32>, vector<32x128xf32>, vector<2x128xf32> -> vector<2x128xf32>
    %94 = arith.addf %92, %93 : vector<2x128xf32>
    %95 = arith.negf %94 : vector<2x128xf32>
    %96 = math.exp %95 : vector<2x128xf32>
    %cst_19 = arith.constant 1.000000e+00 : f32
    %97 = vector.broadcast %cst_19 : f32 to vector<2x128xf32>
    %98 = arith.addf %97, %96 : vector<2x128xf32>
    %99 = arith.divf %97, %98 : vector<2x128xf32>
    %100 = math.tanh %94 : vector<2x128xf32>
    %101 = vector.extract_strided_slice %99 {offsets = [0, 0], sizes = [2, 32], strides = [1, 1]} : vector<2x128xf32> to vector<2x32xf32>
    %102 = vector.extract_strided_slice %99 {offsets = [0, 32], sizes = [2, 32], strides = [1, 1]} : vector<2x128xf32> to vector<2x32xf32>
    %103 = vector.extract_strided_slice %100 {offsets = [0, 64], sizes = [2, 32], strides = [1, 1]} : vector<2x128xf32> to vector<2x32xf32>
    %104 = vector.extract_strided_slice %99 {offsets = [0, 96], sizes = [2, 32], strides = [1, 1]} : vector<2x128xf32> to vector<2x32xf32>
    %105 = arith.mulf %102, %87 : vector<2x32xf32>
    %106 = arith.mulf %101, %103 : vector<2x32xf32>
    %107 = arith.addf %105, %106 : vector<2x32xf32>
    %108 = math.tanh %107 : vector<2x32xf32>
    %109 = arith.mulf %104, %108 : vector<2x32xf32>
    %110 = arith.maximumf %90, %109 : vector<2x32xf32>
    %111 = vector.extract_strided_slice %6 {offsets = [0, 5, 0], sizes = [2, 1, 128], strides = [1, 1, 1]} : vector<2x8x128xf32> to vector<2x1x128xf32>
    %112 = vector.shape_cast %111 : vector<2x1x128xf32> to vector<2x128xf32>
    %cst_20 = arith.constant dense<0.000000e+00> : vector<2x128xf32>
    %113 = tpu.matmul %109, %7, %cst_20 {dimension_numbers = #tpu.dot_dimension_numbers<[1], [0], [0], [1], [0, 0, 1, 1], [], []>} : vector<2x32xf32>, vector<32x128xf32>, vector<2x128xf32> -> vector<2x128xf32>
    %114 = arith.addf %112, %113 : vector<2x128xf32>
    %115 = arith.negf %114 : vector<2x128xf32>
    %116 = math.exp %115 : vector<2x128xf32>
    %cst_21 = arith.constant 1.000000e+00 : f32
    %117 = vector.broadcast %cst_21 : f32 to vector<2x128xf32>
    %118 = arith.addf %117, %116 : vector<2x128xf32>
    %119 = arith.divf %117, %118 : vector<2x128xf32>
    %120 = math.tanh %114 : vector<2x128xf32>
    %121 = vector.extract_strided_slice %119 {offsets = [0, 0], sizes = [2, 32], strides = [1, 1]} : vector<2x128xf32> to vector<2x32xf32>
    %122 = vector.extract_strided_slice %119 {offsets = [0, 32], sizes = [2, 32], strides = [1, 1]} : vector<2x128xf32> to vector<2x32xf32>
    %123 = vector.extract_strided_slice %120 {offsets = [0, 64], sizes = [2, 32], strides = [1, 1]} : vector<2x128xf32> to vector<2x32xf32>
    %124 = vector.extract_strided_slice %119 {offsets = [0, 96], sizes = [2, 32], strides = [1, 1]} : vector<2x128xf32> to vector<2x32xf32>
    %125 = arith.mulf %122, %107 : vector<2x32xf32>
    %126 = arith.mulf %121, %123 : vector<2x32xf32>
    %127 = arith.addf %125, %126 : vector<2x32xf32>
    %128 = math.tanh %127 : vector<2x32xf32>
    %129 = arith.mulf %124, %128 : vector<2x32xf32>
    %130 = arith.maximumf %110, %129 : vector<2x32xf32>
    %131 = vector.extract_strided_slice %6 {offsets = [0, 6, 0], sizes = [2, 1, 128], strides = [1, 1, 1]} : vector<2x8x128xf32> to vector<2x1x128xf32>
    %132 = vector.shape_cast %131 : vector<2x1x128xf32> to vector<2x128xf32>
    %cst_22 = arith.constant dense<0.000000e+00> : vector<2x128xf32>
    %133 = tpu.matmul %129, %7, %cst_22 {dimension_numbers = #tpu.dot_dimension_numbers<[1], [0], [0], [1], [0, 0, 1, 1], [], []>} : vector<2x32xf32>, vector<32x128xf32>, vector<2x128xf32> -> vector<2x128xf32>
    %134 = arith.addf %132, %133 : vector<2x128xf32>
    %135 = arith.negf %134 : vector<2x128xf32>
    %136 = math.exp %135 : vector<2x128xf32>
    %cst_23 = arith.constant 1.000000e+00 : f32
    %137 = vector.broadcast %cst_23 : f32 to vector<2x128xf32>
    %138 = arith.addf %137, %136 : vector<2x128xf32>
    %139 = arith.divf %137, %138 : vector<2x128xf32>
    %140 = math.tanh %134 : vector<2x128xf32>
    %141 = vector.extract_strided_slice %139 {offsets = [0, 0], sizes = [2, 32], strides = [1, 1]} : vector<2x128xf32> to vector<2x32xf32>
    %142 = vector.extract_strided_slice %139 {offsets = [0, 32], sizes = [2, 32], strides = [1, 1]} : vector<2x128xf32> to vector<2x32xf32>
    %143 = vector.extract_strided_slice %140 {offsets = [0, 64], sizes = [2, 32], strides = [1, 1]} : vector<2x128xf32> to vector<2x32xf32>
    %144 = vector.extract_strided_slice %139 {offsets = [0, 96], sizes = [2, 32], strides = [1, 1]} : vector<2x128xf32> to vector<2x32xf32>
    %145 = arith.mulf %142, %127 : vector<2x32xf32>
    %146 = arith.mulf %141, %143 : vector<2x32xf32>
    %147 = arith.addf %145, %146 : vector<2x32xf32>
    %148 = math.tanh %147 : vector<2x32xf32>
    %149 = arith.mulf %144, %148 : vector<2x32xf32>
    %150 = arith.maximumf %130, %149 : vector<2x32xf32>
    %151 = vector.extract_strided_slice %6 {offsets = [0, 7, 0], sizes = [2, 1, 128], strides = [1, 1, 1]} : vector<2x8x128xf32> to vector<2x1x128xf32>
    %152 = vector.shape_cast %151 : vector<2x1x128xf32> to vector<2x128xf32>
    %cst_24 = arith.constant dense<0.000000e+00> : vector<2x128xf32>
    %153 = tpu.matmul %149, %7, %cst_24 {dimension_numbers = #tpu.dot_dimension_numbers<[1], [0], [0], [1], [0, 0, 1, 1], [], []>} : vector<2x32xf32>, vector<32x128xf32>, vector<2x128xf32> -> vector<2x128xf32>
    %154 = arith.addf %152, %153 : vector<2x128xf32>
    %155 = arith.negf %154 : vector<2x128xf32>
    %156 = math.exp %155 : vector<2x128xf32>
    %cst_25 = arith.constant 1.000000e+00 : f32
    %157 = vector.broadcast %cst_25 : f32 to vector<2x128xf32>
    %158 = arith.addf %157, %156 : vector<2x128xf32>
    %159 = arith.divf %157, %158 : vector<2x128xf32>
    %160 = math.tanh %154 : vector<2x128xf32>
    %161 = vector.extract_strided_slice %159 {offsets = [0, 0], sizes = [2, 32], strides = [1, 1]} : vector<2x128xf32> to vector<2x32xf32>
    %162 = vector.extract_strided_slice %159 {offsets = [0, 32], sizes = [2, 32], strides = [1, 1]} : vector<2x128xf32> to vector<2x32xf32>
    %163 = vector.extract_strided_slice %160 {offsets = [0, 64], sizes = [2, 32], strides = [1, 1]} : vector<2x128xf32> to vector<2x32xf32>
    %164 = vector.extract_strided_slice %159 {offsets = [0, 96], sizes = [2, 32], strides = [1, 1]} : vector<2x128xf32> to vector<2x32xf32>
    %165 = arith.mulf %162, %147 : vector<2x32xf32>
    %166 = arith.mulf %161, %163 : vector<2x32xf32>
    %167 = arith.addf %165, %166 : vector<2x32xf32>
    %168 = math.tanh %167 : vector<2x32xf32>
    %169 = arith.mulf %164, %168 : vector<2x32xf32>
    %170 = arith.maximumf %150, %169 : vector<2x32xf32>
    %c0_26 = arith.constant 0 : index
    %c0_27 = arith.constant 0 : index
    %171 = vector.load %arg4[%c0_26, %c0_27] : memref<32x3xf32, #tpu.memory_space<vmem>>, vector<32x3xf32>
    %cst_28 = arith.constant dense<0.000000e+00> : vector<2x3xf32>
    %172 = tpu.matmul %170, %171, %cst_28 {dimension_numbers = #tpu.dot_dimension_numbers<[1], [0], [0], [1], [0, 0, 1, 1], [], []>} : vector<2x32xf32>, vector<32x3xf32>, vector<2x3xf32> -> vector<2x3xf32>
    %c0_29 = arith.constant 0 : index
    %c0_30 = arith.constant 0 : index
    %173 = vector.load %arg5[%c0_29, %c0_30] : memref<1x3xf32, #tpu.memory_space<vmem>>, vector<1x3xf32>
    %174 = vector.broadcast %173 : vector<1x3xf32> to vector<2x3xf32>
    %175 = arith.addf %172, %174 : vector<2x3xf32>
    %c0_31 = arith.constant 0 : index
    %c0_32 = arith.constant 0 : index
    %176 = vector.load %arg6[%c0_31, %c0_32] : memref<2x3xf32, #tpu.memory_space<vmem>>, vector<2x3xf32>
    tpu.vector_store %arg6[%c0_31, %c0_32], %175 {strides = array<i32>} : memref<2x3xf32, #tpu.memory_space<vmem>>, vector<2x3xf32>,
    return
  }
}

</mosaic_0001>

<llo_original>
// kernel: stateful_lstm_forward.1
$region0: #{stateful_lstm_forward.1}
  #allocation0 [shape = 'u32[]', space=smem, size = 0x4, offset = 0x4, fixed_abs, tag = 'smem constant byte address 0x4 - core index']
  #allocation1 [shape = 'u32[144,128]{1,0:T(1,128)}', space=vmem, size = 0x12000, scoped, tag = 'internal scratch']
  %s0 = inlined_call_operand.vmem [shape: f32[16,4], index: 0, kind: input, shape index: {}]
  %s1 = inlined_call_operand.vmem [shape: f32[4,128], index: 1, kind: input, shape index: {}]
  %s2 = inlined_call_operand.vmem [shape: f32[32,128], index: 2, kind: input, shape index: {}]
  %s3 = inlined_call_operand.vmem [shape: f32[1,128], index: 3, kind: input, shape index: {}]
  %s4 = inlined_call_operand.vmem [shape: f32[32,3], index: 4, kind: input, shape index: {}]
  %s5 = inlined_call_operand.vmem [shape: f32[1,3], index: 5, kind: input, shape index: {}]
  %s6 = inlined_call_operand.hbm [shape: f32[2,3], index: 6, kind: output, shape index: {}]
  %s7 = sld [smem:[#allocation0]]
  $region34: #{stateful_lstm_forward.1} parent=0
    _
  %s9 = ssub.s32 1, %s7
  %s10 = scalar_select 0, %s9, %s7
  $region1: #{stateful_lstm_forward.1} parent=0
    #allocation2 [shape = 'u8[1024]{0}', space=vmem, size = 0x400, scoped, tag = 'output window, operand 0, single buffered']
    #allocation3 [shape = 's32[1]{0}', space=sflag, size = 0x4, scoped, tag = 'scoped memory for stateful_lstm_forward.1']
    %11 = vsyncpa [#allocation3], 0
    // Predicated region
    $region2: #{stateful_lstm_forward.1} parent=1 // pred_check
      _
    $region3: #{stateful_lstm_forward.1} parent=1 // pred_check_branch
      %13 = sbr.rel (0) target = $region5
    $region4: #{stateful_lstm_forward.1} parent=1 // pred_region
      _
    $region5: #{stateful_lstm_forward.1} parent=1 // pred_fallthru
      _
    // Predicated region
    $region6: #{stateful_lstm_forward.1} parent=1 // pred_check
      _
    $region7: #{stateful_lstm_forward.1} parent=1 // pred_check_branch
      %15 = sbr.rel (0) target = $region9
    $region8: #{stateful_lstm_forward.1} parent=1 // pred_region
      _
    $region9: #{stateful_lstm_forward.1} parent=1 // pred_fallthru
      _
    // Predicated region
    $region10: #{stateful_lstm_forward.1} parent=1 // pred_check
      _
    $region11: #{stateful_lstm_forward.1} parent=1 // pred_check_branch
      %17 = sbr.rel (0) target = $region13
    $region12: #{stateful_lstm_forward.1} parent=1 // pred_region
      _
    $region13: #{stateful_lstm_forward.1} parent=1 // pred_fallthru
      _
    // Predicated region
    $region14: #{stateful_lstm_forward.1} parent=1 // pred_check
      _
    $region15: #{stateful_lstm_forward.1} parent=1 // pred_check_branch
      %19 = sbr.rel (0) target = $region17
    $region16: #{stateful_lstm_forward.1} parent=1 // pred_region
      _
    $region17: #{stateful_lstm_forward.1} parent=1 // pred_fallthru
      _
    // Predicated region
    $region18: #{stateful_lstm_forward.1} parent=1 // pred_check
      _
    $region19: #{stateful_lstm_forward.1} parent=1 // pred_check_branch
      %21 = sbr.rel (0) target = $region21
    $region20: #{stateful_lstm_forward.1} parent=1 // pred_region
      _
    $region21: #{stateful_lstm_forward.1} parent=1 // pred_fallthru
      _
    // Predicated region
    $region22: #{stateful_lstm_forward.1} parent=1 // pred_check
      _
    $region23: #{stateful_lstm_forward.1} parent=1 // pred_check_branch
      %23 = sbr.rel (0) target = $region25
    $region24: #{stateful_lstm_forward.1} parent=1 // pred_region
      _
    $region25: #{stateful_lstm_forward.1} parent=1 // pred_fallthru
      _
    %v24 = vld [vmem:[%s0] sm:$0xff]
    %v25 = vld [vmem:[%s0 + $0x8] sm:$0xff]
    %v26 = vld [vmem:[%s1] sm:$0xf]
    %v27 = vld [vmem:[%s3] sm:$0x1]
    %v29 = vlaneseq
    %v30 = vshrl.u32 %v29, 7
    %v31 = vsub.s32 0, %v30
    %v32 = vrot.slane %v27, %v31
    %vm34 = vcmask 31744
    %v36 = vsel %vm34, %v24, 0
    %v39 = vsel %vm34, %v25, 0
    %vm41 = vcmask 1043456
    %v43 = vsel %vm41, %v26, 0
    %45 = vmatprep.subr.mxu0 0.0
    %46 = vmatpush1.msra.mxu0 %v43
    %47 = vmatprep.subr.mxu0 0.0
    %48 = vmatpush1.msra.mxu0 0.0
    %49 = vmatprep.subr.mxu0 0.0
    %50 = vmatpush1.msra.mxu0 0.0
    %51 = vmatprep.subr.mxu0 0.0
    %52 = vmatpush1.msra.mxu0 0.0
    %53 = vmatprep.subr.mxu0 0.0
    %54 = vmatpush1.msra.mxu0 0.0
    %55 = vmatprep.subr.mxu0 0.0
    %56 = vmatpush1.msra.mxu0 0.0
    %57 = vmatprep.subr.mxu0 0.0
    %58 = vmatpush1.msra.mxu0 0.0
    %59 = vmatprep.subr.mxu0 0.0
    %60 = vmatpush1.msra.mxu0 0.0
    %61 = vmatprep.subr.mxu0 0.0
    %62 = vmatpush1.msra.mxu0 0.0
    %63 = vmatprep.subr.mxu0 0.0
    %64 = vmatpush1.msra.mxu0 0.0
    %65 = vmatprep.subr.mxu0 0.0
    %66 = vmatpush1.msra.mxu0 0.0
    %67 = vmatprep.subr.mxu0 0.0
    %68 = vmatpush1.msra.mxu0 0.0
    %69 = vmatprep.subr.mxu0 0.0
    %70 = vmatpush1.msra.mxu0 0.0
    %71 = vmatprep.subr.mxu0 0.0
    %72 = vmatpush1.msra.mxu0 0.0
    %73 = vmatprep.subr.mxu0 0.0
    %74 = vmatpush1.msra.mxu0 0.0
    %75 = vmatprep.subr.mxu0 0.0
    %76 = vmatpush1.msra.mxu0 0.0
    %77 = vmatprep.subr.mxu0 0.0
    %78 = vmatpush1.msra.mxu0 0.0
    %79 = vmatprep.subr.mxu0 0.0
    %80 = vmatpush1.msra.mxu0 0.0
    %81 = vmatprep.subr.mxu0 0.0
    %82 = vmatpush1.msra.mxu0 0.0
    %83 = vmatprep.subr.mxu0 0.0
    %84 = vmatpush1.msra.mxu0 0.0
    %85 = vmatprep.subr.mxu0 0.0
    %86 = vmatpush1.msra.mxu0 0.0
    %87 = vmatprep.subr.mxu0 0.0
    %88 = vmatpush1.msra.mxu0 0.0
    %89 = vmatprep.subr.mxu0 0.0
    %90 = vmatpush1.msra.mxu0 0.0
    %91 = vmatprep.subr.mxu0 0.0
    %92 = vmatpush1.msra.mxu0 0.0
    %93 = vmatprep.subr.mxu0 0.0
    %94 = vmatpush1.msra.mxu0 0.0
    %95 = vmatprep.subr.mxu0 0.0
    %96 = vmatpush1.msra.mxu0 0.0
    %97 = vmatprep.subr.mxu0 0.0
    %98 = vmatpush1.msra.mxu0 0.0
    %99 = vmatprep.subr.mxu0 0.0
    %100 = vmatpush1.msra.mxu0 0.0
    %101 = vmatprep.subr.mxu0 0.0
    %102 = vmatpush1.msra.mxu0 0.0
    %103 = vmatprep.subr.mxu0 0.0
    %104 = vmatpush1.msra.mxu0 0.0
    %105 = vmatprep.subr.mxu0 0.0
    %106 = vmatpush1.msra.mxu0 0.0
    %107 = vmatprep.subr.mxu0 0.0
    %108 = vmatpush1.msra.mxu0 0.0
    %109 = vmatprep.mubr.f32.mxu0 0.0
    %110 = vmatmul.mubr.f32.gmra.mrb[0].mxu0 %v36
    %v111 = vpop.f32.mrb[0].mxu0
    %v112 = vadd.f32 %v32, %v111
    %v113 = vpop.f32.mrb[0].mxu0
    %114 = vmatprep.mubr.f32.mxu0 0.0
    %115 = vmatmul.mubr.f32.gmra.mrb[0].mxu0 %v39
    %v116 = vpop.f32.mrb[0].mxu0
    %v117 = vadd.f32 %v32, %v116
    %v118 = vpop.f32.mrb[0].mxu0
    %119 = vdwg.mxu0
    %v120 = vld [vmem:[%s2] sm:$0xff]
    %v121 = vld [vmem:[%s2 + $0x8] sm:$0xff]
    %v122 = vld [vmem:[%s2 + $0x10] sm:$0xff]
    %v123 = vld [vmem:[%s2 + $0x18] sm:$0xff]
    %vm124 = vcmask 261120
    %v126 = vsel %vm124, 0.0, 0
    %128 = vmatprep.subr.mxu0 0.0
    %129 = vmatpush1.msra.mxu0 %v120
    %130 = vmatprep.subr.mxu0 0.0
    %131 = vmatpush1.msra.mxu0 %v121
    %132 = vmatprep.subr.mxu0 0.0
    %133 = vmatpush1.msra.mxu0 %v122
    %134 = vmatprep.subr.mxu0 0.0
    %135 = vmatpush1.msra.mxu0 %v123
    %136 = vmatprep.subr.mxu0 0.0
    %137 = vmatpush1.msra.mxu0 0.0
    %138 = vmatprep.subr.mxu0 0.0
    %139 = vmatpush1.msra.mxu0 0.0
    %140 = vmatprep.subr.mxu0 0.0
    %141 = vmatpush1.msra.mxu0 0.0
    %142 = vmatprep.subr.mxu0 0.0
    %143 = vmatpush1.msra.mxu0 0.0
    %144 = vmatprep.subr.mxu0 0.0
    %145 = vmatpush1.msra.mxu0 0.0
    %146 = vmatprep.subr.mxu0 0.0
    %147 = vmatpush1.msra.mxu0 0.0
    %148 = vmatprep.subr.mxu0 0.0
    %149 = vmatpush1.msra.mxu0 0.0
    %150 = vmatprep.subr.mxu0 0.0
    %151 = vmatpush1.msra.mxu0 0.0
    %152 = vmatprep.subr.mxu0 0.0
    %153 = vmatpush1.msra.mxu0 0.0
    %154 = vmatprep.subr.mxu0 0.0
    %155 = vmatpush1.msra.mxu0 0.0
    %156 = vmatprep.subr.mxu0 0.0
    %157 = vmatpush1.msra.mxu0 0.0
    %158 = vmatprep.subr.mxu0 0.0
    %159 = vmatpush1.msra.mxu0 0.0
    %160 = vmatprep.subr.mxu0 0.0
    %161 = vmatpush1.msra.mxu0 0.0
    %162 = vmatprep.subr.mxu0 0.0
    %163 = vmatpush1.msra.mxu0 0.0
    %164 = vmatprep.subr.mxu0 0.0
    %165 = vmatpush1.msra.mxu0 0.0
    %166 = vmatprep.subr.mxu0 0.0
    %167 = vmatpush1.msra.mxu0 0.0
    %168 = vmatprep.subr.mxu0 0.0
    %169 = vmatpush1.msra.mxu0 0.0
    %170 = vmatprep.subr.mxu0 0.0
    %171 = vmatpush1.msra.mxu0 0.0
    %172 = vmatprep.subr.mxu0 0.0
    %173 = vmatpush1.msra.mxu0 0.0
    %174 = vmatprep.subr.mxu0 0.0
    %175 = vmatpush1.msra.mxu0 0.0
    %176 = vmatprep.subr.mxu0 0.0
    %177 = vmatpush1.msra.mxu0 0.0
    %178 = vmatprep.subr.mxu0 0.0
    %179 = vmatpush1.msra.mxu0 0.0
    %180 = vmatprep.subr.mxu0 0.0
    %181 = vmatpush1.msra.mxu0 0.0
    %182 = vmatprep.subr.mxu0 0.0
    %183 = vmatpush1.msra.mxu0 0.0
    %184 = vmatprep.subr.mxu0 0.0
    %185 = vmatpush1.msra.mxu0 0.0
    %186 = vmatprep.subr.mxu0 0.0
    %187 = vmatpush1.msra.mxu0 0.0
    %188 = vmatprep.subr.mxu0 0.0
    %189 = vmatpush1.msra.mxu0 0.0
    %190 = vmatprep.subr.mxu0 0.0
    %191 = vmatpush1.msra.mxu0 0.0
    %192 = vmatprep.mubr.f32.mxu0 0.0
    %193 = vmatmul.mubr.f32.gmra.mrb[0].mxu0 %v126
    %v194 = vpop.f32.mrb[0].mxu0
    %v195 = vadd.f32 0.0, %v194
    %v196 = vpop.f32.mrb[0].mxu0
    %197 = vdwg.mxu0
    %v199 = vrot.slane %v195, 1
    %v202 = vadd.f32 %v112, %v195
    %v203 = vadd.f32 %v117, %v199
    %v204 = vxor.u32 %v202, 2147483648
    %v205 = vxor.u32 %v203, 2147483648
    %v206 = vmul.f32 %v204, 1.442695
    %v207 = vpow.pop %v206
    %v208 = vmul.f32 %v205, 1.442695
    %v209 = vpow.pop %v208
    %v210 = vadd.f32 %v207, 1.0
    %v211 = vadd.f32 %v209, 1.0
    %v212 = vrcp.pop %v210
    %v213 = vmul.f32 1.0, %v212
    %v214 = vrcp.pop %v211
    %v215 = vmul.f32 1.0, %v214
    %v216 = vtanh.pop %v202
    %v217 = vtanh.pop %v203
    %v218 = vmul.f32 %v213, 0.0
    %v219 = vmul.f32 %v215, 0.0
    %222 = vrot.lane.b32.xlu0 %v216, 64
    %v223 = vpop.permute.xlu0 %222
    %224 = vrot.lane.b32.xlu0 %v217, 64
    %v225 = vpop.permute.xlu0 %224
    %v228 = vmul.f32 %v213, %v223
    %v229 = vmul.f32 %v215, %v225
    %232 = vrot.lane.b32.xlu0 %v228, 32
    %v233 = vpop.permute.xlu0 %232
    %234 = vrot.lane.b32.xlu0 %v229, 32
    %v235 = vpop.permute.xlu0 %234
    %v238 = vadd.f32 %v218, %v233
    %v239 = vadd.f32 %v219, %v235
    %v240 = vtanh.pop %v238
    %v241 = vtanh.pop %v239
    %244 = vrot.lane.b32.xlu0 %v240, 64
    %v245 = vpop.permute.xlu0 %244
    %246 = vrot.lane.b32.xlu0 %v241, 64
    %v247 = vpop.permute.xlu0 %246
    %v250 = vmul.f32 %v213, %v245
    %v251 = vmul.f32 %v215, %v247
    %v254 = vrot.slane %v251, 7
    %vm255 = vcmask 1041409
    %v256 = vsel %vm255, %v254, %v250
    %257 = vrot.lane.b32.xlu0 %v256, 32
    %v258 = vpop.permute.xlu0 %257
    %v259 = vsel %vm124, %v258, 0
    %261 = vmatprep.subr.mxu0 0.0
    %262 = vmatpush1.msra.mxu0 %v120
    %263 = vmatprep.subr.mxu0 0.0
    %264 = vmatpush1.msra.mxu0 %v121
    %265 = vmatprep.subr.mxu0 0.0
    %266 = vmatpush1.msra.mxu0 %v122
    %267 = vmatprep.subr.mxu0 0.0
    %268 = vmatpush1.msra.mxu0 %v123
    %269 = vmatprep.subr.mxu0 0.0
    %270 = vmatpush1.msra.mxu0 0.0
    %271 = vmatprep.subr.mxu0 0.0
    %272 = vmatpush1.msra.mxu0 0.0
    %273 = vmatprep.subr.mxu0 0.0
    %274 = vmatpush1.msra.mxu0 0.0
    %275 = vmatprep.subr.mxu0 0.0
    %276 = vmatpush1.msra.mxu0 0.0
    %277 = vmatprep.subr.mxu0 0.0
    %278 = vmatpush1.msra.mxu0 0.0
    %279 = vmatprep.subr.mxu0 0.0
    %280 = vmatpush1.msra.mxu0 0.0
    %281 = vmatprep.subr.mxu0 0.0
    %282 = vmatpush1.msra.mxu0 0.0
    %283 = vmatprep.subr.mxu0 0.0
    %284 = vmatpush1.msra.mxu0 0.0
    %285 = vmatprep.subr.mxu0 0.0
    %286 = vmatpush1.msra.mxu0 0.0
    %287 = vmatprep.subr.mxu0 0.0
    %288 = vmatpush1.msra.mxu0 0.0
    %289 = vmatprep.subr.mxu0 0.0
    %290 = vmatpush1.msra.mxu0 0.0
    %291 = vmatprep.subr.mxu0 0.0
    %292 = vmatpush1.msra.mxu0 0.0
    %293 = vmatprep.subr.mxu0 0.0
    %294 = vmatpush1.msra.mxu0 0.0
    %295 = vmatprep.subr.mxu0 0.0
    %296 = vmatpush1.msra.mxu0 0.0
    %297 = vmatprep.subr.mxu0 0.0
    %298 = vmatpush1.msra.mxu0 0.0
    %299 = vmatprep.subr.mxu0 0.0
    %300 = vmatpush1.msra.mxu0 0.0
    %301 = vmatprep.subr.mxu0 0.0
    %302 = vmatpush1.msra.mxu0 0.0
    %303 = vmatprep.subr.mxu0 0.0
    %304 = vmatpush1.msra.mxu0 0.0
    %305 = vmatprep.subr.mxu0 0.0
    %306 = vmatpush1.msra.mxu0 0.0
    %307 = vmatprep.subr.mxu0 0.0
    %308 = vmatpush1.msra.mxu0 0.0
    %309 = vmatprep.subr.mxu0 0.0
    %310 = vmatpush1.msra.mxu0 0.0
    %311 = vmatprep.subr.mxu0 0.0
    %312 = vmatpush1.msra.mxu0 0.0
    %313 = vmatprep.subr.mxu0 0.0
    %314 = vmatpush1.msra.mxu0 0.0
    %315 = vmatprep.subr.mxu0 0.0
    %316 = vmatpush1.msra.mxu0 0.0
    %317 = vmatprep.subr.mxu0 0.0
    %318 = vmatpush1.msra.mxu0 0.0
    %319 = vmatprep.subr.mxu0 0.0
    %320 = vmatpush1.msra.mxu0 0.0
    %321 = vmatprep.subr.mxu0 0.0
    %322 = vmatpush1.msra.mxu0 0.0
    %323 = vmatprep.subr.mxu0 0.0
    %324 = vmatpush1.msra.mxu0 0.0
    %325 = vmatprep.mubr.f32.mxu0 0.0
    %326 = vmatmul.mubr.f32.gmra.mrb[0].mxu0 %v259
    %v327 = vpop.f32.mrb[0].mxu0
    %v328 = vadd.f32 0.0, %v327
    %v329 = vpop.f32.mrb[0].mxu0
    %330 = vdwg.mxu0
    %v332 = vrot.slane %v328, 7
    %v335 = vadd.f32 %v112, %v332
    %v336 = vadd.f32 %v117, %v328
    %v337 = vxor.u32 %v335, 2147483648
    %v338 = vxor.u32 %v336, 2147483648
    %v339 = vmul.f32 %v337, 1.442695
    %v340 = vpow.pop %v339
    %v341 = vmul.f32 %v338, 1.442695
    %v342 = vpow.pop %v341
    %v343 = vadd.f32 %v340, 1.0
    %v344 = vadd.f32 %v342, 1.0
    %v345 = vrcp.pop %v343
    %v346 = vmul.f32 1.0, %v345
    %v347 = vrcp.pop %v344
    %v348 = vmul.f32 1.0, %v347
    %v349 = vtanh.pop %v335
    %v350 = vtanh.pop %v336
    %v353 = vrot.slane %v238, 7
    %v354 = vrot.slane %v239, 7
    %v357 = vmul.f32 %v346, %v353
    %v358 = vmul.f32 %v348, %v354
    %361 = vrot.lane.b32.xlu0 %v349, 64
    %v362 = vpop.permute.xlu0 %361
    %363 = vrot.lane.b32.xlu0 %v350, 64
    %v364 = vpop.permute.xlu0 %363
    %v367 = vmul.f32 %v346, %v362
    %v368 = vmul.f32 %v348, %v364
    %371 = vrot.lane.b32.xlu0 %v367, 32
    %v372 = vpop.permute.xlu0 %371
    %373 = vrot.lane.b32.xlu0 %v368, 32
    %v374 = vpop.permute.xlu0 %373
    %v377 = vadd.f32 %v357, %v372
    %v378 = vadd.f32 %v358, %v374
    %v379 = vtanh.pop %v377
    %v380 = vtanh.pop %v378
    %383 = vrot.lane.b32.xlu0 %v379, 64
    %v384 = vpop.permute.xlu0 %383
    %385 = vrot.lane.b32.xlu0 %v380, 64
    %v386 = vpop.permute.xlu0 %385
    %v389 = vmul.f32 %v346, %v384
    %v390 = vmul.f32 %v348, %v386
    %v393 = vrot.slane %v389, 1
    %v394 = vrot.slane %v390, 1
    %v397 = vmax.f32 %v250, %v393
    %v398 = vmax.f32 %v251, %v394
    %v399 = vsel %vm255, %v390, %v393
    %400 = vrot.lane.b32.xlu0 %v399, 32
    %v401 = vpop.permute.xlu0 %400
    %v402 = vsel %vm124, %v401, 0
    %404 = vmatprep.subr.mxu0 0.0
    %405 = vmatpush1.msra.mxu0 %v120
    %406 = vmatprep.subr.mxu0 0.0
    %407 = vmatpush1.msra.mxu0 %v121
    %408 = vmatprep.subr.mxu0 0.0
    %409 = vmatpush1.msra.mxu0 %v122
    %410 = vmatprep.subr.mxu0 0.0
    %411 = vmatpush1.msra.mxu0 %v123
    %412 = vmatprep.subr.mxu0 0.0
    %413 = vmatpush1.msra.mxu0 0.0
    %414 = vmatprep.subr.mxu0 0.0
    %415 = vmatpush1.msra.mxu0 0.0
    %416 = vmatprep.subr.mxu0 0.0
    %417 = vmatpush1.msra.mxu0 0.0
    %418 = vmatprep.subr.mxu0 0.0
    %419 = vmatpush1.msra.mxu0 0.0
    %420 = vmatprep.subr.mxu0 0.0
    %421 = vmatpush1.msra.mxu0 0.0
    %422 = vmatprep.subr.mxu0 0.0
    %423 = vmatpush1.msra.mxu0 0.0
    %424 = vmatprep.subr.mxu0 0.0
    %425 = vmatpush1.msra.mxu0 0.0
    %426 = vmatprep.subr.mxu0 0.0
    %427 = vmatpush1.msra.mxu0 0.0
    %428 = vmatprep.subr.mxu0 0.0
    %429 = vmatpush1.msra.mxu0 0.0
    %430 = vmatprep.subr.mxu0 0.0
    %431 = vmatpush1.msra.mxu0 0.0
    %432 = vmatprep.subr.mxu0 0.0
    %433 = vmatpush1.msra.mxu0 0.0
    %434 = vmatprep.subr.mxu0 0.0
    %435 = vmatpush1.msra.mxu0 0.0
    %436 = vmatprep.subr.mxu0 0.0
    %437 = vmatpush1.msra.mxu0 0.0
    %438 = vmatprep.subr.mxu0 0.0
    %439 = vmatpush1.msra.mxu0 0.0
    %440 = vmatprep.subr.mxu0 0.0
    %441 = vmatpush1.msra.mxu0 0.0
    %442 = vmatprep.subr.mxu0 0.0
    %443 = vmatpush1.msra.mxu0 0.0
    %444 = vmatprep.subr.mxu0 0.0
    %445 = vmatpush1.msra.mxu0 0.0
    %446 = vmatprep.subr.mxu0 0.0
    %447 = vmatpush1.msra.mxu0 0.0
    %448 = vmatprep.subr.mxu0 0.0
    %449 = vmatpush1.msra.mxu0 0.0
    %450 = vmatprep.subr.mxu0 0.0
    %451 = vmatpush1.msra.mxu0 0.0
    %452 = vmatprep.subr.mxu0 0.0
    %453 = vmatpush1.msra.mxu0 0.0
    %454 = vmatprep.subr.mxu0 0.0
    %455 = vmatpush1.msra.mxu0 0.0
    %456 = vmatprep.subr.mxu0 0.0
    %457 = vmatpush1.msra.mxu0 0.0
    %458 = vmatprep.subr.mxu0 0.0
    %459 = vmatpush1.msra.mxu0 0.0
    %460 = vmatprep.subr.mxu0 0.0
    %461 = vmatpush1.msra.mxu0 0.0
    %462 = vmatprep.subr.mxu0 0.0
    %463 = vmatpush1.msra.mxu0 0.0
    %464 = vmatprep.subr.mxu0 0.0
    %465 = vmatpush1.msra.mxu0 0.0
    %466 = vmatprep.subr.mxu0 0.0
    %467 = vmatpush1.msra.mxu0 0.0
    %468 = vmatprep.mubr.f32.mxu0 0.0
    %469 = vmatmul.mubr.f32.gmra.mrb[0].mxu0 %v402
    %v470 = vpop.f32.mrb[0].mxu0
    %v471 = vadd.f32 0.0, %v470
    %v472 = vpop.f32.mrb[0].mxu0
    %473 = vdwg.mxu0
    %v475 = vrot.slane %v471, 6
    %v476 = vrot.slane %v471, 7
    %v479 = vadd.f32 %v112, %v475
    %v480 = vadd.f32 %v117, %v476
    %v481 = vxor.u32 %v479, 2147483648
    %v482 = vxor.u32 %v480, 2147483648
    %v483 = vmul.f32 %v481, 1.442695
    %v484 = vpow.pop %v483
    %v485 = vmul.f32 %v482, 1.442695
    %v486 = vpow.pop %v485
    %v487 = vadd.f32 %v484, 1.0
    %v488 = vadd.f32 %v486, 1.0
    %v489 = vrcp.pop %v487
    %v490 = vmul.f32 1.0, %v489
    %v491 = vrcp.pop %v488
    %v492 = vmul.f32 1.0, %v491
    %v493 = vtanh.pop %v479
    %v494 = vtanh.pop %v480
    %v497 = vrot.slane %v377, 7
    %v498 = vrot.slane %v378, 7
    %v501 = vmul.f32 %v490, %v497
    %v502 = vmul.f32 %v492, %v498
    %505 = vrot.lane.b32.xlu0 %v493, 64
    %v506 = vpop.permute.xlu0 %505
    %507 = vrot.lane.b32.xlu0 %v494, 64
    %v508 = vpop.permute.xlu0 %507
    %v511 = vmul.f32 %v490, %v506
    %v512 = vmul.f32 %v492, %v508
    %515 = vrot.lane.b32.xlu0 %v511, 32
    %v516 = vpop.permute.xlu0 %515
    %517 = vrot.lane.b32.xlu0 %v512, 32
    %v518 = vpop.permute.xlu0 %517
    %v521 = vadd.f32 %v501, %v516
    %v522 = vadd.f32 %v502, %v518
    %v523 = vtanh.pop %v521
    %v524 = vtanh.pop %v522
    %527 = vrot.lane.b32.xlu0 %v523, 64
    %v528 = vpop.permute.xlu0 %527
    %529 = vrot.lane.b32.xlu0 %v524, 64
    %v530 = vpop.permute.xlu0 %529
    %v533 = vmul.f32 %v490, %v528
    %v534 = vmul.f32 %v492, %v530
    %v537 = vrot.slane %v533, 2
    %v538 = vrot.slane %v534, 2
    %v541 = vmax.f32 %v397, %v537
    %v542 = vmax.f32 %v398, %v538
    %v543 = vrot.slane %v534, 1
    %v544 = vsel %vm255, %v543, %v537
    %545 = vrot.lane.b32.xlu0 %v544, 32
    %v546 = vpop.permute.xlu0 %545
    %v547 = vsel %vm124, %v546, 0
    %549 = vmatprep.subr.mxu0 0.0
    %550 = vmatpush1.msra.mxu0 %v120
    %551 = vmatprep.subr.mxu0 0.0
    %552 = vmatpush1.msra.mxu0 %v121
    %553 = vmatprep.subr.mxu0 0.0
    %554 = vmatpush1.msra.mxu0 %v122
    %555 = vmatprep.subr.mxu0 0.0
    %556 = vmatpush1.msra.mxu0 %v123
    %557 = vmatprep.subr.mxu0 0.0
    %558 = vmatpush1.msra.mxu0 0.0
    %559 = vmatprep.subr.mxu0 0.0
    %560 = vmatpush1.msra.mxu0 0.0
    %561 = vmatprep.subr.mxu0 0.0
    %562 = vmatpush1.msra.mxu0 0.0
    %563 = vmatprep.subr.mxu0 0.0
    %564 = vmatpush1.msra.mxu0 0.0
    %565 = vmatprep.subr.mxu0 0.0
    %566 = vmatpush1.msra.mxu0 0.0
    %567 = vmatprep.subr.mxu0 0.0
    %568 = vmatpush1.msra.mxu0 0.0
    %569 = vmatprep.subr.mxu0 0.0
    %570 = vmatpush1.msra.mxu0 0.0
    %571 = vmatprep.subr.mxu0 0.0
    %572 = vmatpush1.msra.mxu0 0.0
    %573 = vmatprep.subr.mxu0 0.0
    %574 = vmatpush1.msra.mxu0 0.0
    %575 = vmatprep.subr.mxu0 0.0
    %576 = vmatpush1.msra.mxu0 0.0
    %577 = vmatprep.subr.mxu0 0.0
    %578 = vmatpush1.msra.mxu0 0.0
    %579 = vmatprep.subr.mxu0 0.0
    %580 = vmatpush1.msra.mxu0 0.0
    %581 = vmatprep.subr.mxu0 0.0
    %582 = vmatpush1.msra.mxu0 0.0
    %583 = vmatprep.subr.mxu0 0.0
    %584 = vmatpush1.msra.mxu0 0.0
    %585 = vmatprep.subr.mxu0 0.0
    %586 = vmatpush1.msra.mxu0 0.0
    %587 = vmatprep.subr.mxu0 0.0
    %588 = vmatpush1.msra.mxu0 0.0
    %589 = vmatprep.subr.mxu0 0.0
    %590 = vmatpush1.msra.mxu0 0.0
    %591 = vmatprep.subr.mxu0 0.0
    %592 = vmatpush1.msra.mxu0 0.0
    %593 = vmatprep.subr.mxu0 0.0
    %594 = vmatpush1.msra.mxu0 0.0
    %595 = vmatprep.subr.mxu0 0.0
    %596 = vmatpush1.msra.mxu0 0.0
    %597 = vmatprep.subr.mxu0 0.0
    %598 = vmatpush1.msra.mxu0 0.0
    %599 = vmatprep.subr.mxu0 0.0
    %600 = vmatpush1.msra.mxu0 0.0
    %601 = vmatprep.subr.mxu0 0.0
    %602 = vmatpush1.msra.mxu0 0.0
    %603 = vmatprep.subr.mxu0 0.0
    %604 = vmatpush1.msra.mxu0 0.0
    %605 = vmatprep.subr.mxu0 0.0
    %606 = vmatpush1.msra.mxu0 0.0
    %607 = vmatprep.subr.mxu0 0.0
    %608 = vmatpush1.msra.mxu0 0.0
    %609 = vmatprep.subr.mxu0 0.0
    %610 = vmatpush1.msra.mxu0 0.0
    %611 = vmatprep.subr.mxu0 0.0
    %612 = vmatpush1.msra.mxu0 0.0
    %613 = vmatprep.mubr.f32.mxu0 0.0
    %614 = vmatmul.mubr.f32.gmra.mrb[0].mxu0 %v547
    %v615 = vpop.f32.mrb[0].mxu0
    %v616 = vadd.f32 0.0, %v615
    %v617 = vpop.f32.mrb[0].mxu0
    %618 = vdwg.mxu0
    %v620 = vrot.slane %v616, 5
    %v621 = vrot.slane %v616, 6
    %v624 = vadd.f32 %v112, %v620
    %v625 = vadd.f32 %v117, %v621
    %v626 = vxor.u32 %v624, 2147483648
    %v627 = vxor.u32 %v625, 2147483648
    %v628 = vmul.f32 %v626, 1.442695
    %v629 = vpow.pop %v628
    %v630 = vmul.f32 %v627, 1.442695
    %v631 = vpow.pop %v630
    %v632 = vadd.f32 %v629, 1.0
    %v633 = vadd.f32 %v631, 1.0
    %v634 = vrcp.pop %v632
    %v635 = vmul.f32 1.0, %v634
    %v636 = vrcp.pop %v633
    %v637 = vmul.f32 1.0, %v636
    %v638 = vtanh.pop %v624
    %v639 = vtanh.pop %v625
    %v642 = vrot.slane %v521, 7
    %v643 = vrot.slane %v522, 7
    %v646 = vmul.f32 %v635, %v642
    %v647 = vmul.f32 %v637, %v643
    %650 = vrot.lane.b32.xlu0 %v638, 64
    %v651 = vpop.permute.xlu0 %650
    %652 = vrot.lane.b32.xlu0 %v639, 64
    %v653 = vpop.permute.xlu0 %652
    %v656 = vmul.f32 %v635, %v651
    %v657 = vmul.f32 %v637, %v653
    %660 = vrot.lane.b32.xlu0 %v656, 32
    %v661 = vpop.permute.xlu0 %660
    %662 = vrot.lane.b32.xlu0 %v657, 32
    %v663 = vpop.permute.xlu0 %662
    %v666 = vadd.f32 %v646, %v661
    %v667 = vadd.f32 %v647, %v663
    %v668 = vtanh.pop %v666
    %v669 = vtanh.pop %v667
    %672 = vrot.lane.b32.xlu0 %v668, 64
    %v673 = vpop.permute.xlu0 %672
    %674 = vrot.lane.b32.xlu0 %v669, 64
    %v675 = vpop.permute.xlu0 %674
    %v678 = vmul.f32 %v635, %v673
    %v679 = vmul.f32 %v637, %v675
    %v682 = vrot.slane %v678, 3
    %v683 = vrot.slane %v679, 3
    %v686 = vmax.f32 %v541, %v682
    %v687 = vmax.f32 %v542, %v683
    %v688 = vrot.slane %v679, 2
    %v689 = vsel %vm255, %v688, %v682
    %690 = vrot.lane.b32.xlu0 %v689, 32
    %v691 = vpop.permute.xlu0 %690
    %v692 = vsel %vm124, %v691, 0
    %694 = vmatprep.subr.mxu0 0.0
    %695 = vmatpush1.msra.mxu0 %v120
    %696 = vmatprep.subr.mxu0 0.0
    %697 = vmatpush1.msra.mxu0 %v121
    %698 = vmatprep.subr.mxu0 0.0
    %699 = vmatpush1.msra.mxu0 %v122
    %700 = vmatprep.subr.mxu0 0.0
    %701 = vmatpush1.msra.mxu0 %v123
    %702 = vmatprep.subr.mxu0 0.0
    %703 = vmatpush1.msra.mxu0 0.0
    %704 = vmatprep.subr.mxu0 0.0
    %705 = vmatpush1.msra.mxu0 0.0
    %706 = vmatprep.subr.mxu0 0.0
    %707 = vmatpush1.msra.mxu0 0.0
    %708 = vmatprep.subr.mxu0 0.0
    %709 = vmatpush1.msra.mxu0 0.0
    %710 = vmatprep.subr.mxu0 0.0
    %711 = vmatpush1.msra.mxu0 0.0
    %712 = vmatprep.subr.mxu0 0.0
    %713 = vmatpush1.msra.mxu0 0.0
    %714 = vmatprep.subr.mxu0 0.0
    %715 = vmatpush1.msra.mxu0 0.0
    %716 = vmatprep.subr.mxu0 0.0
    %717 = vmatpush1.msra.mxu0 0.0
    %718 = vmatprep.subr.mxu0 0.0
    %719 = vmatpush1.msra.mxu0 0.0
    %720 = vmatprep.subr.mxu0 0.0
    %721 = vmatpush1.msra.mxu0 0.0
    %722 = vmatprep.subr.mxu0 0.0
    %723 = vmatpush1.msra.mxu0 0.0
    %724 = vmatprep.subr.mxu0 0.0
    %725 = vmatpush1.msra.mxu0 0.0
    %726 = vmatprep.subr.mxu0 0.0
    %727 = vmatpush1.msra.mxu0 0.0
    %728 = vmatprep.subr.mxu0 0.0
    %729 = vmatpush1.msra.mxu0 0.0
    %730 = vmatprep.subr.mxu0 0.0
    %731 = vmatpush1.msra.mxu0 0.0
    %732 = vmatprep.subr.mxu0 0.0
    %733 = vmatpush1.msra.mxu0 0.0
    %734 = vmatprep.subr.mxu0 0.0
    %735 = vmatpush1.msra.mxu0 0.0
    %736 = vmatprep.subr.mxu0 0.0
    %737 = vmatpush1.msra.mxu0 0.0
    %738 = vmatprep.subr.mxu0 0.0
    %739 = vmatpush1.msra.mxu0 0.0
    %740 = vmatprep.subr.mxu0 0.0
    %741 = vmatpush1.msra.mxu0 0.0
    %742 = vmatprep.subr.mxu0 0.0
    %743 = vmatpush1.msra.mxu0 0.0
    %744 = vmatprep.subr.mxu0 0.0
    %745 = vmatpush1.msra.mxu0 0.0
    %746 = vmatprep.subr.mxu0 0.0
    %747 = vmatpush1.msra.mxu0 0.0
    %748 = vmatprep.subr.mxu0 0.0
    %749 = vmatpush1.msra.mxu0 0.0
    %750 = vmatprep.subr.mxu0 0.0
    %751 = vmatpush1.msra.mxu0 0.0
    %752 = vmatprep.subr.mxu0 0.0
    %753 = vmatpush1.msra.mxu0 0.0
    %754 = vmatprep.subr.mxu0 0.0
    %755 = vmatpush1.msra.mxu0 0.0
    %756 = vmatprep.subr.mxu0 0.0
    %757 = vmatpush1.msra.mxu0 0.0
    %758 = vmatprep.mubr.f32.mxu0 0.0
    %759 = vmatmul.mubr.f32.gmra.mrb[0].mxu0 %v692
    %v760 = vpop.f32.mrb[0].mxu0
    %v761 = vadd.f32 0.0, %v760
    %v762 = vpop.f32.mrb[0].mxu0
    %763 = vdwg.mxu0
    %v765 = vrot.slane %v761, 4
    %v766 = vrot.slane %v761, 5
    %v769 = vadd.f32 %v112, %v765
    %v770 = vadd.f32 %v117, %v766
    %v771 = vxor.u32 %v769, 2147483648
    %v772 = vxor.u32 %v770, 2147483648
    %v773 = vmul.f32 %v771, 1.442695
    %v774 = vpow.pop %v773
    %v775 = vmul.f32 %v772, 1.442695
    %v776 = vpow.pop %v775
    %v777 = vadd.f32 %v774, 1.0
    %v778 = vadd.f32 %v776, 1.0
    %v779 = vrcp.pop %v777
    %v780 = vmul.f32 1.0, %v779
    %v781 = vrcp.pop %v778
    %v782 = vmul.f32 1.0, %v781
    %v783 = vtanh.pop %v769
    %v784 = vtanh.pop %v770
    %v787 = vrot.slane %v666, 7
    %v788 = vrot.slane %v667, 7
    %v791 = vmul.f32 %v780, %v787
    %v792 = vmul.f32 %v782, %v788
    %795 = vrot.lane.b32.xlu0 %v783, 64
    %v796 = vpop.permute.xlu0 %795
    %797 = vrot.lane.b32.xlu0 %v784, 64
    %v798 = vpop.permute.xlu0 %797
    %v801 = vmul.f32 %v780, %v796
    %v802 = vmul.f32 %v782, %v798
    %805 = vrot.lane.b32.xlu0 %v801, 32
    %v806 = vpop.permute.xlu0 %805
    %807 = vrot.lane.b32.xlu0 %v802, 32
    %v808 = vpop.permute.xlu0 %807
    %v811 = vadd.f32 %v791, %v806
    %v812 = vadd.f32 %v792, %v808
    %v813 = vtanh.pop %v811
    %v814 = vtanh.pop %v812
    %817 = vrot.lane.b32.xlu0 %v813, 64
    %v818 = vpop.permute.xlu0 %817
    %819 = vrot.lane.b32.xlu0 %v814, 64
    %v820 = vpop.permute.xlu0 %819
    %v823 = vmul.f32 %v780, %v818
    %v824 = vmul.f32 %v782, %v820
    %v827 = vrot.slane %v823, 4
    %v828 = vrot.slane %v824, 4
    %v831 = vmax.f32 %v686, %v827
    %v832 = vmax.f32 %v687, %v828
    %v833 = vrot.slane %v824, 3
    %v834 = vsel %vm255, %v833, %v827
    %835 = vrot.lane.b32.xlu0 %v834, 32
    %v836 = vpop.permute.xlu0 %835
    %v837 = vsel %vm124, %v836, 0
    %839 = vmatprep.subr.mxu0 0.0
    %840 = vmatpush1.msra.mxu0 %v120
    %841 = vmatprep.subr.mxu0 0.0
    %842 = vmatpush1.msra.mxu0 %v121
    %843 = vmatprep.subr.mxu0 0.0
    %844 = vmatpush1.msra.mxu0 %v122
    %845 = vmatprep.subr.mxu0 0.0
    %846 = vmatpush1.msra.mxu0 %v123
    %847 = vmatprep.subr.mxu0 0.0
    %848 = vmatpush1.msra.mxu0 0.0
    %849 = vmatprep.subr.mxu0 0.0
    %850 = vmatpush1.msra.mxu0 0.0
    %851 = vmatprep.subr.mxu0 0.0
    %852 = vmatpush1.msra.mxu0 0.0
    %853 = vmatprep.subr.mxu0 0.0
    %854 = vmatpush1.msra.mxu0 0.0
    %855 = vmatprep.subr.mxu0 0.0
    %856 = vmatpush1.msra.mxu0 0.0
    %857 = vmatprep.subr.mxu0 0.0
    %858 = vmatpush1.msra.mxu0 0.0
    %859 = vmatprep.subr.mxu0 0.0
    %860 = vmatpush1.msra.mxu0 0.0
    %861 = vmatprep.subr.mxu0 0.0
    %862 = vmatpush1.msra.mxu0 0.0
    %863 = vmatprep.subr.mxu0 0.0
    %864 = vmatpush1.msra.mxu0 0.0
    %865 = vmatprep.subr.mxu0 0.0
    %866 = vmatpush1.msra.mxu0 0.0
    %867 = vmatprep.subr.mxu0 0.0
    %868 = vmatpush1.msra.mxu0 0.0
    %869 = vmatprep.subr.mxu0 0.0
    %870 = vmatpush1.msra.mxu0 0.0
    %871 = vmatprep.subr.mxu0 0.0
    %872 = vmatpush1.msra.mxu0 0.0
    %873 = vmatprep.subr.mxu0 0.0
    %874 = vmatpush1.msra.mxu0 0.0
    %875 = vmatprep.subr.mxu0 0.0
    %876 = vmatpush1.msra.mxu0 0.0
    %877 = vmatprep.subr.mxu0 0.0
    %878 = vmatpush1.msra.mxu0 0.0
    %879 = vmatprep.subr.mxu0 0.0
    %880 = vmatpush1.msra.mxu0 0.0
    %881 = vmatprep.subr.mxu0 0.0
    %882 = vmatpush1.msra.mxu0 0.0
    %883 = vmatprep.subr.mxu0 0.0
    %884 = vmatpush1.msra.mxu0 0.0
    %885 = vmatprep.subr.mxu0 0.0
    %886 = vmatpush1.msra.mxu0 0.0
    %887 = vmatprep.subr.mxu0 0.0
    %888 = vmatpush1.msra.mxu0 0.0
    %889 = vmatprep.subr.mxu0 0.0
    %890 = vmatpush1.msra.mxu0 0.0
    %891 = vmatprep.subr.mxu0 0.0
    %892 = vmatpush1.msra.mxu0 0.0
    %893 = vmatprep.subr.mxu0 0.0
    %894 = vmatpush1.msra.mxu0 0.0
    %895 = vmatprep.subr.mxu0 0.0
    %896 = vmatpush1.msra.mxu0 0.0
    %897 = vmatprep.subr.mxu0 0.0
    %898 = vmatpush1.msra.mxu0 0.0
    %899 = vmatprep.subr.mxu0 0.0
    %900 = vmatpush1.msra.mxu0 0.0
    %901 = vmatprep.subr.mxu0 0.0
    %902 = vmatpush1.msra.mxu0 0.0
    %903 = vmatprep.mubr.f32.mxu0 0.0
    %904 = vmatmul.mubr.f32.gmra.mrb[0].mxu0 %v837
    %v905 = vpop.f32.mrb[0].mxu0
    %v906 = vadd.f32 0.0, %v905
    %v907 = vpop.f32.mrb[0].mxu0
    %908 = vdwg.mxu0
    %v910 = vrot.slane %v906, 3
    %v911 = vrot.slane %v906, 4
    %v914 = vadd.f32 %v112, %v910
    %v915 = vadd.f32 %v117, %v911
    %v916 = vxor.u32 %v914, 2147483648
    %v917 = vxor.u32 %v915, 2147483648
    %v918 = vmul.f32 %v916, 1.442695
    %v919 = vpow.pop %v918
    %v920 = vmul.f32 %v917, 1.442695
    %v921 = vpow.pop %v920
    %v922 = vadd.f32 %v919, 1.0
    %v923 = vadd.f32 %v921, 1.0
    %v924 = vrcp.pop %v922
    %v925 = vmul.f32 1.0, %v924
    %v926 = vrcp.pop %v923
    %v927 = vmul.f32 1.0, %v926
    %v928 = vtanh.pop %v914
    %v929 = vtanh.pop %v915
    %v932 = vrot.slane %v811, 7
    %v933 = vrot.slane %v812, 7
    %v936 = vmul.f32 %v925, %v932
    %v937 = vmul.f32 %v927, %v933
    %940 = vrot.lane.b32.xlu0 %v928, 64
    %v941 = vpop.permute.xlu0 %940
    %942 = vrot.lane.b32.xlu0 %v929, 64
    %v943 = vpop.permute.xlu0 %942
    %v946 = vmul.f32 %v925, %v941
    %v947 = vmul.f32 %v927, %v943
    %950 = vrot.lane.b32.xlu0 %v946, 32
    %v951 = vpop.permute.xlu0 %950
    %952 = vrot.lane.b32.xlu0 %v947, 32
    %v953 = vpop.permute.xlu0 %952
    %v956 = vadd.f32 %v936, %v951
    %v957 = vadd.f32 %v937, %v953
    %v958 = vtanh.pop %v956
    %v959 = vtanh.pop %v957
    %962 = vrot.lane.b32.xlu0 %v958, 64
    %v963 = vpop.permute.xlu0 %962
    %964 = vrot.lane.b32.xlu0 %v959, 64
    %v965 = vpop.permute.xlu0 %964
    %v968 = vmul.f32 %v925, %v963
    %v969 = vmul.f32 %v927, %v965
    %v972 = vrot.slane %v968, 5
    %v973 = vrot.slane %v969, 5
    %v976 = vmax.f32 %v831, %v972
    %v977 = vmax.f32 %v832, %v973
    %v978 = vrot.slane %v969, 4
    %v979 = vsel %vm255, %v978, %v972
    %980 = vrot.lane.b32.xlu0 %v979, 32
    %v981 = vpop.permute.xlu0 %980
    %v982 = vsel %vm124, %v981, 0
    %984 = vmatprep.subr.mxu0 0.0
    %985 = vmatpush1.msra.mxu0 %v120
    %986 = vmatprep.subr.mxu0 0.0
    %987 = vmatpush1.msra.mxu0 %v121
    %988 = vmatprep.subr.mxu0 0.0
    %989 = vmatpush1.msra.mxu0 %v122
    %990 = vmatprep.subr.mxu0 0.0
    %991 = vmatpush1.msra.mxu0 %v123
    %992 = vmatprep.subr.mxu0 0.0
    %993 = vmatpush1.msra.mxu0 0.0
    %994 = vmatprep.subr.mxu0 0.0
    %995 = vmatpush1.msra.mxu0 0.0
    %996 = vmatprep.subr.mxu0 0.0
    %997 = vmatpush1.msra.mxu0 0.0
    %998 = vmatprep.subr.mxu0 0.0
    %999 = vmatpush1.msra.mxu0 0.0
    %1000 = vmatprep.subr.mxu0 0.0
    %1001 = vmatpush1.msra.mxu0 0.0
    %1002 = vmatprep.subr.mxu0 0.0
    %1003 = vmatpush1.msra.mxu0 0.0
    %1004 = vmatprep.subr.mxu0 0.0
    %1005 = vmatpush1.msra.mxu0 0.0
    %1006 = vmatprep.subr.mxu0 0.0
    %1007 = vmatpush1.msra.mxu0 0.0
    %1008 = vmatprep.subr.mxu0 0.0
    %1009 = vmatpush1.msra.mxu0 0.0
    %1010 = vmatprep.subr.mxu0 0.0
    %1011 = vmatpush1.msra.mxu0 0.0
    %1012 = vmatprep.subr.mxu0 0.0
    %1013 = vmatpush1.msra.mxu0 0.0
    %1014 = vmatprep.subr.mxu0 0.0
    %1015 = vmatpush1.msra.mxu0 0.0
    %1016 = vmatprep.subr.mxu0 0.0
    %1017 = vmatpush1.msra.mxu0 0.0
    %1018 = vmatprep.subr.mxu0 0.0
    %1019 = vmatpush1.msra.mxu0 0.0
    %1020 = vmatprep.subr.mxu0 0.0
    %1021 = vmatpush1.msra.mxu0 0.0
    %1022 = vmatprep.subr.mxu0 0.0
    %1023 = vmatpush1.msra.mxu0 0.0
    %1024 = vmatprep.subr.mxu0 0.0
    %1025 = vmatpush1.msra.mxu0 0.0
    %1026 = vmatprep.subr.mxu0 0.0
    %1027 = vmatpush1.msra.mxu0 0.0
    %1028 = vmatprep.subr.mxu0 0.0
    %1029 = vmatpush1.msra.mxu0 0.0
    %1030 = vmatprep.subr.mxu0 0.0
    %1031 = vmatpush1.msra.mxu0 0.0
    %1032 = vmatprep.subr.mxu0 0.0
    %1033 = vmatpush1.msra.mxu0 0.0
    %1034 = vmatprep.subr.mxu0 0.0
    %1035 = vmatpush1.msra.mxu0 0.0
    %1036 = vmatprep.subr.mxu0 0.0
    %1037 = vmatpush1.msra.mxu0 0.0
    %1038 = vmatprep.subr.mxu0 0.0
    %1039 = vmatpush1.msra.mxu0 0.0
    %1040 = vmatprep.subr.mxu0 0.0
    %1041 = vmatpush1.msra.mxu0 0.0
    %1042 = vmatprep.subr.mxu0 0.0
    %1043 = vmatpush1.msra.mxu0 0.0
    %1044 = vmatprep.subr.mxu0 0.0
    %1045 = vmatpush1.msra.mxu0 0.0
    %1046 = vmatprep.subr.mxu0 0.0
    %1047 = vmatpush1.msra.mxu0 0.0
    %1048 = vmatprep.mubr.f32.mxu0 0.0
    %1049 = vmatmul.mubr.f32.gmra.mrb[0].mxu0 %v982
    %v1050 = vpop.f32.mrb[0].mxu0
    %v1051 = vadd.f32 0.0, %v1050
    %v1052 = vpop.f32.mrb[0].mxu0
    %1053 = vdwg.mxu0
    %v1055 = vrot.slane %v1051, 2
    %v1056 = vrot.slane %v1051, 3
    %v1059 = vadd.f32 %v112, %v1055
    %v1060 = vadd.f32 %v117, %v1056
    %v1061 = vxor.u32 %v1059, 2147483648
    %v1062 = vxor.u32 %v1060, 2147483648
    %v1063 = vmul.f32 %v1061, 1.442695
    %v1064 = vpow.pop %v1063
    %v1065 = vmul.f32 %v1062, 1.442695
    %v1066 = vpow.pop %v1065
    %v1067 = vadd.f32 %v1064, 1.0
    %v1068 = vadd.f32 %v1066, 1.0
    %v1069 = vrcp.pop %v1067
    %v1070 = vmul.f32 1.0, %v1069
    %v1071 = vrcp.pop %v1068
    %v1072 = vmul.f32 1.0, %v1071
    %v1073 = vtanh.pop %v1059
    %v1074 = vtanh.pop %v1060
    %v1077 = vrot.slane %v956, 7
    %v1078 = vrot.slane %v957, 7
    %v1081 = vmul.f32 %v1070, %v1077
    %v1082 = vmul.f32 %v1072, %v1078
    %1085 = vrot.lane.b32.xlu0 %v1073, 64
    %v1086 = vpop.permute.xlu0 %1085
    %1087 = vrot.lane.b32.xlu0 %v1074, 64
    %v1088 = vpop.permute.xlu0 %1087
    %v1091 = vmul.f32 %v1070, %v1086
    %v1092 = vmul.f32 %v1072, %v1088
    %1095 = vrot.lane.b32.xlu0 %v1091, 32
    %v1096 = vpop.permute.xlu0 %1095
    %1097 = vrot.lane.b32.xlu0 %v1092, 32
    %v1098 = vpop.permute.xlu0 %1097
    %v1101 = vadd.f32 %v1081, %v1096
    %v1102 = vadd.f32 %v1082, %v1098
    %v1103 = vtanh.pop %v1101
    %v1104 = vtanh.pop %v1102
    %1107 = vrot.lane.b32.xlu0 %v1103, 64
    %v1108 = vpop.permute.xlu0 %1107
    %1109 = vrot.lane.b32.xlu0 %v1104, 64
    %v1110 = vpop.permute.xlu0 %1109
    %v1113 = vmul.f32 %v1070, %v1108
    %v1114 = vmul.f32 %v1072, %v1110
    %v1117 = vrot.slane %v1113, 6
    %v1118 = vrot.slane %v1114, 6
    %v1121 = vmax.f32 %v976, %v1117
    %v1122 = vmax.f32 %v977, %v1118
    %v1123 = vrot.slane %v1114, 5
    %v1124 = vsel %vm255, %v1123, %v1117
    %1125 = vrot.lane.b32.xlu0 %v1124, 32
    %v1126 = vpop.permute.xlu0 %1125
    %v1127 = vsel %vm124, %v1126, 0
    %1129 = vmatprep.subr.mxu0 0.0
    %1130 = vmatpush1.msra.mxu0 %v120
    %1131 = vmatprep.subr.mxu0 0.0
    %1132 = vmatpush1.msra.mxu0 %v121
    %1133 = vmatprep.subr.mxu0 0.0
    %1134 = vmatpush1.msra.mxu0 %v122
    %1135 = vmatprep.subr.mxu0 0.0
    %1136 = vmatpush1.msra.mxu0 %v123
    %1137 = vmatprep.subr.mxu0 0.0
    %1138 = vmatpush1.msra.mxu0 0.0
    %1139 = vmatprep.subr.mxu0 0.0
    %1140 = vmatpush1.msra.mxu0 0.0
    %1141 = vmatprep.subr.mxu0 0.0
    %1142 = vmatpush1.msra.mxu0 0.0
    %1143 = vmatprep.subr.mxu0 0.0
    %1144 = vmatpush1.msra.mxu0 0.0
    %1145 = vmatprep.subr.mxu0 0.0
    %1146 = vmatpush1.msra.mxu0 0.0
    %1147 = vmatprep.subr.mxu0 0.0
    %1148 = vmatpush1.msra.mxu0 0.0
    %1149 = vmatprep.subr.mxu0 0.0
    %1150 = vmatpush1.msra.mxu0 0.0
    %1151 = vmatprep.subr.mxu0 0.0
    %1152 = vmatpush1.msra.mxu0 0.0
    %1153 = vmatprep.subr.mxu0 0.0
    %1154 = vmatpush1.msra.mxu0 0.0
    %1155 = vmatprep.subr.mxu0 0.0
    %1156 = vmatpush1.msra.mxu0 0.0
    %1157 = vmatprep.subr.mxu0 0.0
    %1158 = vmatpush1.msra.mxu0 0.0
    %1159 = vmatprep.subr.mxu0 0.0
    %1160 = vmatpush1.msra.mxu0 0.0
    %1161 = vmatprep.subr.mxu0 0.0
    %1162 = vmatpush1.msra.mxu0 0.0
    %1163 = vmatprep.subr.mxu0 0.0
    %1164 = vmatpush1.msra.mxu0 0.0
    %1165 = vmatprep.subr.mxu0 0.0
    %1166 = vmatpush1.msra.mxu0 0.0
    %1167 = vmatprep.subr.mxu0 0.0
    %1168 = vmatpush1.msra.mxu0 0.0
    %1169 = vmatprep.subr.mxu0 0.0
    %1170 = vmatpush1.msra.mxu0 0.0
    %1171 = vmatprep.subr.mxu0 0.0
    %1172 = vmatpush1.msra.mxu0 0.0
    %1173 = vmatprep.subr.mxu0 0.0
    %1174 = vmatpush1.msra.mxu0 0.0
    %1175 = vmatprep.subr.mxu0 0.0
    %1176 = vmatpush1.msra.mxu0 0.0
    %1177 = vmatprep.subr.mxu0 0.0
    %1178 = vmatpush1.msra.mxu0 0.0
    %1179 = vmatprep.subr.mxu0 0.0
    %1180 = vmatpush1.msra.mxu0 0.0
    %1181 = vmatprep.subr.mxu0 0.0
    %1182 = vmatpush1.msra.mxu0 0.0
    %1183 = vmatprep.subr.mxu0 0.0
    %1184 = vmatpush1.msra.mxu0 0.0
    %1185 = vmatprep.subr.mxu0 0.0
    %1186 = vmatpush1.msra.mxu0 0.0
    %1187 = vmatprep.subr.mxu0 0.0
    %1188 = vmatpush1.msra.mxu0 0.0
    %1189 = vmatprep.subr.mxu0 0.0
    %1190 = vmatpush1.msra.mxu0 0.0
    %1191 = vmatprep.subr.mxu0 0.0
    %1192 = vmatpush1.msra.mxu0 0.0
    %1193 = vmatprep.mubr.f32.mxu0 0.0
    %1194 = vmatmul.mubr.f32.gmra.mrb[0].mxu0 %v1127
    %v1195 = vpop.f32.mrb[0].mxu0
    %v1196 = vadd.f32 0.0, %v1195
    %v1197 = vpop.f32.mrb[0].mxu0
    %1198 = vdwg.mxu0
    %v1200 = vrot.slane %v1196, 1
    %v1201 = vrot.slane %v1196, 2
    %v1204 = vadd.f32 %v112, %v1200
    %v1205 = vadd.f32 %v117, %v1201
    %v1206 = vxor.u32 %v1204, 2147483648
    %v1207 = vxor.u32 %v1205, 2147483648
    %v1208 = vmul.f32 %v1206, 1.442695
    %v1209 = vpow.pop %v1208
    %v1210 = vmul.f32 %v1207, 1.442695
    %v1211 = vpow.pop %v1210
    %v1212 = vadd.f32 %v1209, 1.0
    %v1213 = vadd.f32 %v1211, 1.0
    %v1214 = vrcp.pop %v1212
    %v1215 = vmul.f32 1.0, %v1214
    %v1216 = vrcp.pop %v1213
    %v1217 = vmul.f32 1.0, %v1216
    %v1218 = vtanh.pop %v1204
    %v1219 = vtanh.pop %v1205
    %v1222 = vrot.slane %v1101, 7
    %v1223 = vrot.slane %v1102, 7
    %v1226 = vmul.f32 %v1215, %v1222
    %v1227 = vmul.f32 %v1217, %v1223
    %1230 = vrot.lane.b32.xlu0 %v1218, 64
    %v1231 = vpop.permute.xlu0 %1230
    %1232 = vrot.lane.b32.xlu0 %v1219, 64
    %v1233 = vpop.permute.xlu0 %1232
    %v1236 = vmul.f32 %v1215, %v1231
    %v1237 = vmul.f32 %v1217, %v1233
    %1240 = vrot.lane.b32.xlu0 %v1236, 32
    %v1241 = vpop.permute.xlu0 %1240
    %1242 = vrot.lane.b32.xlu0 %v1237, 32
    %v1243 = vpop.permute.xlu0 %1242
    %v1246 = vadd.f32 %v1226, %v1241
    %v1247 = vadd.f32 %v1227, %v1243
    %v1248 = vtanh.pop %v1246
    %v1249 = vtanh.pop %v1247
    %1252 = vrot.lane.b32.xlu0 %v1248, 64
    %v1253 = vpop.permute.xlu0 %1252
    %1254 = vrot.lane.b32.xlu0 %v1249, 64
    %v1255 = vpop.permute.xlu0 %1254
    %v1258 = vmul.f32 %v1215, %v1253
    %v1259 = vmul.f32 %v1217, %v1255
    %v1262 = vrot.slane %v1258, 7
    %v1263 = vrot.slane %v1259, 7
    %v1266 = vmax.f32 %v1121, %v1262
    %v1267 = vmax.f32 %v1122, %v1263
    %v1268 = vld [vmem:[%s4] sm:$0xff]
    %v1269 = vld [vmem:[%s4 + $0x8] sm:$0xff]
    %v1270 = vld [vmem:[%s4 + $0x10] sm:$0xff]
    %v1271 = vld [vmem:[%s4 + $0x18] sm:$0xff]
    %v1272 = vld [vmem:[%s5] sm:$0x1]
    %v1274 = vlaneseq
    %v1275 = vshrl.u32 %v1274, 7
    %v1276 = vsub.s32 0, %v1275
    %v1277 = vrot.slane %v1272, %v1276
    %v1281 = vrot.slane %v1267, 7
    %v1282 = vsel %vm255, %v1281, %v1266
    %1283 = vrot.lane.b32.xlu0 %v1282, 32
    %v1284 = vpop.permute.xlu0 %1283
    %v1285 = vsel %vm124, %v1284, 0
    %1287 = vmatprep.subr.mxu0 0.0
    %1288 = vmatpush1.msra.mxu0 %v1268
    %1289 = vmatprep.subr.mxu0 0.0
    %1290 = vmatpush1.msra.mxu0 %v1269
    %1291 = vmatprep.subr.mxu0 0.0
    %1292 = vmatpush1.msra.mxu0 %v1270
    %1293 = vmatprep.subr.mxu0 0.0
    %1294 = vmatpush1.msra.mxu0 %v1271
    %1295 = vmatprep.subr.mxu0 0.0
    %1296 = vmatpush1.msra.mxu0 0.0
    %1297 = vmatprep.subr.mxu0 0.0
    %1298 = vmatpush1.msra.mxu0 0.0
    %1299 = vmatprep.subr.mxu0 0.0
    %1300 = vmatpush1.msra.mxu0 0.0
    %1301 = vmatprep.subr.mxu0 0.0
    %1302 = vmatpush1.msra.mxu0 0.0
    %1303 = vmatprep.subr.mxu0 0.0
    %1304 = vmatpush1.msra.mxu0 0.0
    %1305 = vmatprep.subr.mxu0 0.0
    %1306 = vmatpush1.msra.mxu0 0.0
    %1307 = vmatprep.subr.mxu0 0.0
    %1308 = vmatpush1.msra.mxu0 0.0
    %1309 = vmatprep.subr.mxu0 0.0
    %1310 = vmatpush1.msra.mxu0 0.0
    %1311 = vmatprep.subr.mxu0 0.0
    %1312 = vmatpush1.msra.mxu0 0.0
    %1313 = vmatprep.subr.mxu0 0.0
    %1314 = vmatpush1.msra.mxu0 0.0
    %1315 = vmatprep.subr.mxu0 0.0
    %1316 = vmatpush1.msra.mxu0 0.0
    %1317 = vmatprep.subr.mxu0 0.0
    %1318 = vmatpush1.msra.mxu0 0.0
    %1319 = vmatprep.subr.mxu0 0.0
    %1320 = vmatpush1.msra.mxu0 0.0
    %1321 = vmatprep.subr.mxu0 0.0
    %1322 = vmatpush1.msra.mxu0 0.0
    %1323 = vmatprep.subr.mxu0 0.0
    %1324 = vmatpush1.msra.mxu0 0.0
    %1325 = vmatprep.subr.mxu0 0.0
    %1326 = vmatpush1.msra.mxu0 0.0
    %1327 = vmatprep.subr.mxu0 0.0
    %1328 = vmatpush1.msra.mxu0 0.0
    %1329 = vmatprep.subr.mxu0 0.0
    %1330 = vmatpush1.msra.mxu0 0.0
    %1331 = vmatprep.subr.mxu0 0.0
    %1332 = vmatpush1.msra.mxu0 0.0
    %1333 = vmatprep.subr.mxu0 0.0
    %1334 = vmatpush1.msra.mxu0 0.0
    %1335 = vmatprep.subr.mxu0 0.0
    %1336 = vmatpush1.msra.mxu0 0.0
    %1337 = vmatprep.subr.mxu0 0.0
    %1338 = vmatpush1.msra.mxu0 0.0
    %1339 = vmatprep.subr.mxu0 0.0
    %1340 = vmatpush1.msra.mxu0 0.0
    %1341 = vmatprep.subr.mxu0 0.0
    %1342 = vmatpush1.msra.mxu0 0.0
    %1343 = vmatprep.subr.mxu0 0.0
    %1344 = vmatpush1.msra.mxu0 0.0
    %1345 = vmatprep.subr.mxu0 0.0
    %1346 = vmatpush1.msra.mxu0 0.0
    %1347 = vmatprep.subr.mxu0 0.0
    %1348 = vmatpush1.msra.mxu0 0.0
    %1349 = vmatprep.subr.mxu0 0.0
    %1350 = vmatpush1.msra.mxu0 0.0
    %1351 = vmatprep.mubr.f32.mxu0 0.0
    %1352 = vmatmul.mubr.f32.gmra.mrb[0].mxu0 %v1285
    %v1353 = vpop.f32.mrb[0].mxu0
    %v1354 = vadd.f32 %v1277, %v1353
    %v1355 = vpop.f32.mrb[0].mxu0
    %1356 = vdwg.mxu0
    %vm1357 = vcmask 17408
    %1358 = vst.msk [vmem:[#allocation2] sm:$0x3] %vm1357, %v1354
    // Predicated region
    $region26: #{stateful_lstm_forward.1} parent=1 // pred_check
      _
    $region27: #{stateful_lstm_forward.1} parent=1 // pred_check_branch
      %1360 = sbr.rel (0) target = $region29
    $region28: #{stateful_lstm_forward.1} parent=1 // pred_region
      %s1362 = ssub.s32 32, 32
      %1363 = vsyncadd [#allocation3], %s1362
      %s1365 = sshll.u32 [#allocation2], 4
      %s1366 = int_to_ptr.vmem [resolvable:$true] %s1365
      %1368 = dma.vmem_to_hbm [thread:$0]  %s1366, 32, %s6, [#allocation3]
    $region29: #{stateful_lstm_forward.1} parent=1 // pred_fallthru
      _
    // Predicated region
    $region30: #{stateful_lstm_forward.1} parent=1 // pred_check
      _
    $region31: #{stateful_lstm_forward.1} parent=1 // pred_check_branch
      %1370 = sbr.rel (0) target = $region33
    $region32: #{stateful_lstm_forward.1} parent=1 // pred_region
      %1371 = dma.done [#allocation3], 32
    $region33: #{stateful_lstm_forward.1} parent=1 // pred_fallthru
      _
    %1372 = vsyncpa [#allocation3], 1

</llo_original>
